<compile_context>
chip_gen: v5e
topology: v5e:2x2
jax: 0.10.0
libtpu: 0.0.40
codegen_flags: <defaults>
</compile_context>

<pallas_src>
import jax
import jax.numpy as jnp
from jax.experimental import pallas as pl
from jax.experimental.pallas import tpu as pltpu


def embedding_kernel(keys_ref, xT_ref, valsT_ref, w1T_ref, b1_ref, w2T_ref,
                     b2_ref, outT_ref):
    # keys_ref : (K, D)  f32  SMEM  (scalar reads)
    # xT_ref   : (D, bB) f32  VMEM  (batch on lanes)
    # valsT_ref: (E, K)  f32  VMEM
    # w1T_ref  : (H, D)  f32  VMEM
    # b1_ref   : (H, 1)  f32  VMEM
    # w2T_ref  : (E, H)  f32  VMEM
    # b2_ref   : (E, 1)  f32  VMEM
    # outT_ref : (E, bB) f32  VMEM
    D, bB = xT_ref.shape
    E, K = valsT_ref.shape
    H = w1T_ref.shape[0]

    xT = xT_ref[...]        # (D, bB)
    valsT = valsT_ref[...]  # (E, K)
    w1T = w1T_ref[...]      # (H, D)
    w2T = w2T_ref[...]      # (E, H)

    # ---- MLP path: Linear(D->H) -> ReLU -> Linear(H->E).
    # Contraction depth is 3-4, so unrolled VPU broadcast-FMAs (no MXU);
    # biases folded into the accumulator init.
    h = jnp.broadcast_to(b1_ref[...], (H, bB))
    for d in range(D):
        h = h + w1T[:, d:d + 1] * xT[d:d + 1, :]          # (H,1)*(1,bB)
    h = jnp.maximum(h, 0.0)                                # (H, bB)

    out = jnp.broadcast_to(b2_ref[...], (E, bB))
    for j in range(H):
        out = out + w2T[:, j:j + 1] * h[j:j + 1, :]        # (E,1)*(1,bB)

    # ---- Exact-match path: lane-parallel over the batch, scalar keys from
    # SMEM, boolean-AND accumulation across the D coordinates, then a vector
    # select per key (matched rows are overwritten with the fixed value).
    # Rows matching several distinct keys cannot occur in the reference
    # (torch masked assignment would shape-error), so last-match-wins is
    # equivalent.
    for k in range(K):
        eq_k = xT[0:1, :] == keys_ref[k, 0]                # (1, bB) bool
        for d in range(1, D):
            eq_k = eq_k & (xT[d:d + 1, :] == keys_ref[k, d])
        val_k = jnp.broadcast_to(valsT[:, k:k + 1], (E, bB))
        out = jnp.where(eq_k, val_k, out)                  # (E, bB) vsel

    outT_ref[...] = out


def embedding_forward(x, keys, vals, w1, b1, w2, b2, *, block_b=1024):
    """x:(B,D) keys:(K,D) vals:(K,E) w1:(D,H) b1:(1,H) w2:(H,E) b2:(1,E)."""
    B, D = x.shape
    K, E = vals.shape
    H = w1.shape[1]

    # Lane-dense batch tile: multiple of 128 lanes, capped at block_b rows.
    bB = min(block_b, ((B + 127) // 128) * 128)
    B_pad = ((B + bB - 1) // bB) * bB
    grid = (B_pad // bB,)

    f32 = jnp.float32
    xp = jnp.zeros((B_pad, D), f32).at[:B].set(x.astype(f32))
    xT = xp.T                              # (D, B_pad): batch on lanes
    valsT = vals.astype(f32).T             # (E, K)
    w1T = w1.astype(f32).T                 # (H, D)
    w2T = w2.astype(f32).T                 # (E, H)
    b1c = b1.astype(f32).reshape(H, 1)
    b2c = b2.astype(f32).reshape(E, 1)
    keysf = keys.astype(f32)

    # Explicit VMEM budget: double-buffered x/out tiles + resident params,
    # plus headroom; stays well under v7x's 64 MiB physical VMEM.
    tile_bytes = 4 * bB * (D + E)
    param_bytes = 4 * (E * K + H * D + H + E * H + E)
    vmem_limit = min(64 * 1024 * 1024,
                     max(8 * 1024 * 1024, 4 * (2 * tile_bytes) + 4 * param_bytes))

    outT = pl.pallas_call(
        embedding_kernel,
        out_shape=jax.ShapeDtypeStruct((E, B_pad), f32),
        grid=grid,
        in_specs=[
            pl.BlockSpec(memory_space=pltpu.MemorySpace.SMEM),   # keys (scalars)
            pl.BlockSpec((D, bB), lambda i: (0, i)),             # xT (streamed)
            pl.BlockSpec((E, K), lambda i: (0, 0)),              # valsT (resident)
            pl.BlockSpec((H, D), lambda i: (0, 0)),              # w1T
            pl.BlockSpec((H, 1), lambda i: (0, 0)),              # b1
            pl.BlockSpec((E, H), lambda i: (0, 0)),              # w2T
            pl.BlockSpec((E, 1), lambda i: (0, 0)),              # b2
        ],
        out_specs=pl.BlockSpec((E, bB), lambda i: (0, i)),
        compiler_params=pltpu.CompilerParams(
            dimension_semantics=("parallel",),
            vmem_limit_bytes=int(vmem_limit),
        ),
    )(keysf, xT, valsT, w1T, b1c, w2T, b2c)

    return outT[:, :B].T                   # back to (B, E) row-major


def reference_forward(x, keys, vals, w1, b1, w2, b2):
    """Pure-JAX reference mirroring the PyTorch forward (exact f32)."""
    hp = jax.lax.Precision.HIGHEST
    eq = jnp.all(x[:, None, :] == keys[None, :, :], axis=-1)      # (B, K)
    any_m = jnp.any(eq, axis=-1)                                  # (B,)
    h = jnp.maximum(jnp.dot(x, w1, precision=hp) + b1, 0.0)
    mlp = jnp.dot(h, w2, precision=hp) + b2
    fixed = jnp.sum(eq[:, :, None].astype(jnp.float32) * vals[None, :, :], axis=1)
    return jnp.where(any_m[:, None], fixed, mlp)


if __name__ == "__main__":
    # Small, forward-consistent shapes.
    B = 8              # batch of material-parameter rows
    in_dim = 4         # input feature dim
    hidden_dim = 4     # fixed in the module
    emb_dim = 32       # material_embedding.dim
    num_materials = 5  # only for the (unused-in-forward) embeddings param
    K = 3              # number of fixed points

    key = jax.random.PRNGKey(0)
    k_emb, k_keys, k_vals, k_w1, k_b1, k_w2, k_b2, k_x = jax.random.split(key, 8)

    # Parameters (deterministic, synthetic).
    embeddings = jax.random.normal(k_emb, (num_materials, emb_dim), jnp.float32)
    # ^ kept for fidelity; not used in forward() (matches the PyTorch module).
    fixed_keys = jax.random.normal(k_keys, (K, in_dim), jnp.float32)
    fixed_vals = jax.random.normal(k_vals, (K, emb_dim), jnp.float32)
    w1 = jax.random.normal(k_w1, (in_dim, hidden_dim), jnp.float32) * 0.5
    b1 = jax.random.normal(k_b1, (1, hidden_dim), jnp.float32) * 0.1
    w2 = jax.random.normal(k_w2, (hidden_dim, emb_dim), jnp.float32) * 0.5
    b2 = jax.random.normal(k_b2, (1, emb_dim), jnp.float32) * 0.1

    # Inputs: random rows, rows 0 and 3 set to exact fixed-point keys so both
    # branches of the forward are exercised.
    x = jax.random.normal(k_x, (B, in_dim), jnp.float32)
    x = x.at[0].set(fixed_keys[0])
    x = x.at[3].set(fixed_keys[2])

    out = embedding_forward(x, fixed_keys, fixed_vals, w1, b1, w2, b2)
    out = jax.block_until_ready(out)

    ref = reference_forward(x, fixed_keys, fixed_vals, w1, b1, w2, b2)
    assert out.shape == (B, emb_dim)
    assert jnp.allclose(out, ref, atol=1e-5, rtol=1e-5), "mismatch vs reference"

    print("KERNEL_OK")
</pallas_src>

<mosaic_0001>
module attributes {stable_mosaic.version = 11 : i64} {
  func.func @embedding_kernel(%arg0: i32, %arg1: memref<3x4xf32, #tpu.memory_space<smem>>, %arg2: memref<4x128xf32, #tpu.memory_space<vmem>>, %arg3: memref<32x3xf32, #tpu.memory_space<vmem>>, %arg4: memref<4x4xf32, #tpu.memory_space<vmem>>, %arg5: memref<4x1xf32, #tpu.memory_space<vmem>>, %arg6: memref<32x4xf32, #tpu.memory_space<vmem>>, %arg7: memref<32x1xf32, #tpu.memory_space<vmem>>, %arg8: memref<32x128xf32, #tpu.memory_space<vmem>>) attributes {dimension_semantics = [#tpu.dimension_semantics<parallel>], iteration_bounds = array<i64: 1>, scalar_prefetch = 0 : i64, scratch_operands = 0 : i64, tpu.core_type = #tpu.core_type<tc>, window_params = [{transform_indices = @transform_0, window_bounds = array<i64: 3, 4>}, {transform_indices = @transform_1, window_bounds = array<i64: 4, 128>}, {pipeline_mode = #tpu.pipeline_mode<synchronous>, transform_indices = @transform_2, window_bounds = array<i64: 32, 3>}, {pipeline_mode = #tpu.pipeline_mode<synchronous>, transform_indices = @transform_3, window_bounds = array<i64: 4, 4>}, {pipeline_mode = #tpu.pipeline_mode<synchronous>, transform_indices = @transform_4, window_bounds = array<i64: 4, 1>}, {pipeline_mode = #tpu.pipeline_mode<synchronous>, transform_indices = @transform_5, window_bounds = array<i64: 32, 4>}, {pipeline_mode = #tpu.pipeline_mode<synchronous>, transform_indices = @transform_6, window_bounds = array<i64: 32, 1>}, {transform_indices = @transform_7, window_bounds = array<i64: 32, 128>}]} {
    %c0 = arith.constant 0 : index
    %c0_0 = arith.constant 0 : index
    %0 = vector.load %arg2[%c0, %c0_0] : memref<4x128xf32, #tpu.memory_space<vmem>>, vector<4x128xf32>
    %c0_1 = arith.constant 0 : index
    %c0_2 = arith.constant 0 : index
    %1 = vector.load %arg3[%c0_1, %c0_2] : memref<32x3xf32, #tpu.memory_space<vmem>>, vector<32x3xf32>
    %c0_3 = arith.constant 0 : index
    %c0_4 = arith.constant 0 : index
    %2 = vector.load %arg4[%c0_3, %c0_4] : memref<4x4xf32, #tpu.memory_space<vmem>>, vector<4x4xf32>
    %c0_5 = arith.constant 0 : index
    %c0_6 = arith.constant 0 : index
    %3 = vector.load %arg6[%c0_5, %c0_6] : memref<32x4xf32, #tpu.memory_space<vmem>>, vector<32x4xf32>
    %c0_7 = arith.constant 0 : index
    %c0_8 = arith.constant 0 : index
    %4 = vector.load %arg5[%c0_7, %c0_8] : memref<4x1xf32, #tpu.memory_space<vmem>>, vector<4x1xf32>
    %5 = vector.shape_cast %4 : vector<4x1xf32> to vector<4x1xf32>
    %6 = vector.broadcast %5 : vector<4x1xf32> to vector<4x128xf32>
    %7 = vector.extract_strided_slice %2 {offsets = [0, 0], sizes = [4, 1], strides = [1, 1]} : vector<4x4xf32> to vector<4x1xf32>
    %8 = vector.extract_strided_slice %0 {offsets = [0, 0], sizes = [1, 128], strides = [1, 1]} : vector<4x128xf32> to vector<1x128xf32>
    %9 = vector.broadcast %7 : vector<4x1xf32> to vector<4x128xf32>
    %10 = vector.broadcast %8 : vector<1x128xf32> to vector<4x128xf32>
    %11 = arith.mulf %9, %10 : vector<4x128xf32>
    %12 = arith.addf %6, %11 : vector<4x128xf32>
    %13 = vector.extract_strided_slice %2 {offsets = [0, 1], sizes = [4, 1], strides = [1, 1]} : vector<4x4xf32> to vector<4x1xf32>
    %14 = vector.extract_strided_slice %0 {offsets = [1, 0], sizes = [1, 128], strides = [1, 1]} : vector<4x128xf32> to vector<1x128xf32>
    %15 = vector.broadcast %13 : vector<4x1xf32> to vector<4x128xf32>
    %16 = vector.broadcast %14 : vector<1x128xf32> to vector<4x128xf32>
    %17 = arith.mulf %15, %16 : vector<4x128xf32>
    %18 = arith.addf %12, %17 : vector<4x128xf32>
    %19 = vector.extract_strided_slice %2 {offsets = [0, 2], sizes = [4, 1], strides = [1, 1]} : vector<4x4xf32> to vector<4x1xf32>
    %20 = vector.extract_strided_slice %0 {offsets = [2, 0], sizes = [1, 128], strides = [1, 1]} : vector<4x128xf32> to vector<1x128xf32>
    %21 = vector.broadcast %19 : vector<4x1xf32> to vector<4x128xf32>
    %22 = vector.broadcast %20 : vector<1x128xf32> to vector<4x128xf32>
    %23 = arith.mulf %21, %22 : vector<4x128xf32>
    %24 = arith.addf %18, %23 : vector<4x128xf32>
    %25 = vector.extract_strided_slice %2 {offsets = [0, 3], sizes = [4, 1], strides = [1, 1]} : vector<4x4xf32> to vector<4x1xf32>
    %26 = vector.extract_strided_slice %0 {offsets = [3, 0], sizes = [1, 128], strides = [1, 1]} : vector<4x128xf32> to vector<1x128xf32>
    %27 = vector.broadcast %25 : vector<4x1xf32> to vector<4x128xf32>
    %28 = vector.broadcast %26 : vector<1x128xf32> to vector<4x128xf32>
    %29 = arith.mulf %27, %28 : vector<4x128xf32>
    %30 = arith.addf %24, %29 : vector<4x128xf32>
    %cst = arith.constant 0.000000e+00 : f32
    %31 = vector.broadcast %cst : f32 to vector<4x128xf32>
    %32 = arith.maximumf %30, %31 : vector<4x128xf32>
    %c0_9 = arith.constant 0 : index
    %c0_10 = arith.constant 0 : index
    %33 = vector.load %arg7[%c0_9, %c0_10] : memref<32x1xf32, #tpu.memory_space<vmem>>, vector<32x1xf32>
    %34 = vector.shape_cast %33 : vector<32x1xf32> to vector<32x1xf32>
    %35 = vector.broadcast %34 : vector<32x1xf32> to vector<32x128xf32>
    %36 = vector.extract_strided_slice %3 {offsets = [0, 0], sizes = [32, 1], strides = [1, 1]} : vector<32x4xf32> to vector<32x1xf32>
    %37 = vector.extract_strided_slice %32 {offsets = [0, 0], sizes = [1, 128], strides = [1, 1]} : vector<4x128xf32> to vector<1x128xf32>
    %38 = vector.broadcast %36 : vector<32x1xf32> to vector<32x128xf32>
    %39 = vector.broadcast %37 : vector<1x128xf32> to vector<32x128xf32>
    %40 = arith.mulf %38, %39 : vector<32x128xf32>
    %41 = arith.addf %35, %40 : vector<32x128xf32>
    %42 = vector.extract_strided_slice %3 {offsets = [0, 1], sizes = [32, 1], strides = [1, 1]} : vector<32x4xf32> to vector<32x1xf32>
    %43 = vector.extract_strided_slice %32 {offsets = [1, 0], sizes = [1, 128], strides = [1, 1]} : vector<4x128xf32> to vector<1x128xf32>
    %44 = vector.broadcast %42 : vector<32x1xf32> to vector<32x128xf32>
    %45 = vector.broadcast %43 : vector<1x128xf32> to vector<32x128xf32>
    %46 = arith.mulf %44, %45 : vector<32x128xf32>
    %47 = arith.addf %41, %46 : vector<32x128xf32>
    %48 = vector.extract_strided_slice %3 {offsets = [0, 2], sizes = [32, 1], strides = [1, 1]} : vector<32x4xf32> to vector<32x1xf32>
    %49 = vector.extract_strided_slice %32 {offsets = [2, 0], sizes = [1, 128], strides = [1, 1]} : vector<4x128xf32> to vector<1x128xf32>
    %50 = vector.broadcast %48 : vector<32x1xf32> to vector<32x128xf32>
    %51 = vector.broadcast %49 : vector<1x128xf32> to vector<32x128xf32>
    %52 = arith.mulf %50, %51 : vector<32x128xf32>
    %53 = arith.addf %47, %52 : vector<32x128xf32>
    %54 = vector.extract_strided_slice %3 {offsets = [0, 3], sizes = [32, 1], strides = [1, 1]} : vector<32x4xf32> to vector<32x1xf32>
    %55 = vector.extract_strided_slice %32 {offsets = [3, 0], sizes = [1, 128], strides = [1, 1]} : vector<4x128xf32> to vector<1x128xf32>
    %56 = vector.broadcast %54 : vector<32x1xf32> to vector<32x128xf32>
    %57 = vector.broadcast %55 : vector<1x128xf32> to vector<32x128xf32>
    %58 = arith.mulf %56, %57 : vector<32x128xf32>
    %59 = arith.addf %53, %58 : vector<32x128xf32>
    %60 = vector.extract_strided_slice %0 {offsets = [0, 0], sizes = [1, 128], strides = [1, 1]} : vector<4x128xf32> to vector<1x128xf32>
    %c0_11 = arith.constant 0 : index
    %c0_12 = arith.constant 0 : index
    %61 = memref.load %arg1[%c0_11, %c0_12] : memref<3x4xf32, #tpu.memory_space<smem>>
    %62 = vector.broadcast %61 : f32 to vector<1x128xf32>
    %63 = arith.cmpf oeq, %60, %62 : vector<1x128xf32>
    %64 = vector.extract_strided_slice %0 {offsets = [1, 0], sizes = [1, 128], strides = [1, 1]} : vector<4x128xf32> to vector<1x128xf32>
    %c0_13 = arith.constant 0 : index
    %c1 = arith.constant 1 : index
    %65 = memref.load %arg1[%c0_13, %c1] : memref<3x4xf32, #tpu.memory_space<smem>>
    %66 = vector.broadcast %65 : f32 to vector<1x128xf32>
    %67 = arith.cmpf oeq, %64, %66 : vector<1x128xf32>
    %68 = arith.andi %63, %67 : vector<1x128xi1>
    %69 = vector.extract_strided_slice %0 {offsets = [2, 0], sizes = [1, 128], strides = [1, 1]} : vector<4x128xf32> to vector<1x128xf32>
    %c0_14 = arith.constant 0 : index
    %c2 = arith.constant 2 : index
    %70 = memref.load %arg1[%c0_14, %c2] : memref<3x4xf32, #tpu.memory_space<smem>>
    %71 = vector.broadcast %70 : f32 to vector<1x128xf32>
    %72 = arith.cmpf oeq, %69, %71 : vector<1x128xf32>
    %73 = arith.andi %68, %72 : vector<1x128xi1>
    %74 = vector.extract_strided_slice %0 {offsets = [3, 0], sizes = [1, 128], strides = [1, 1]} : vector<4x128xf32> to vector<1x128xf32>
    %c0_15 = arith.constant 0 : index
    %c3 = arith.constant 3 : index
    %75 = memref.load %arg1[%c0_15, %c3] : memref<3x4xf32, #tpu.memory_space<smem>>
    %76 = vector.broadcast %75 : f32 to vector<1x128xf32>
    %77 = arith.cmpf oeq, %74, %76 : vector<1x128xf32>
    %78 = arith.andi %73, %77 : vector<1x128xi1>
    %79 = vector.extract_strided_slice %1 {offsets = [0, 0], sizes = [32, 1], strides = [1, 1]} : vector<32x3xf32> to vector<32x1xf32>
    %80 = vector.shape_cast %79 : vector<32x1xf32> to vector<32x1xf32>
    %81 = vector.broadcast %80 : vector<32x1xf32> to vector<32x128xf32>
    %82 = vector.shape_cast %78 : vector<1x128xi1> to vector<1x128xi1>
    %83 = vector.broadcast %82 : vector<1x128xi1> to vector<32x128xi1>
    %84 = arith.select %83, %81, %59 : vector<32x128xi1>, vector<32x128xf32>
    %85 = vector.extract_strided_slice %0 {offsets = [0, 0], sizes = [1, 128], strides = [1, 1]} : vector<4x128xf32> to vector<1x128xf32>
    %c1_16 = arith.constant 1 : index
    %c0_17 = arith.constant 0 : index
    %86 = memref.load %arg1[%c1_16, %c0_17] : memref<3x4xf32, #tpu.memory_space<smem>>
    %87 = vector.broadcast %86 : f32 to vector<1x128xf32>
    %88 = arith.cmpf oeq, %85, %87 : vector<1x128xf32>
    %89 = vector.extract_strided_slice %0 {offsets = [1, 0], sizes = [1, 128], strides = [1, 1]} : vector<4x128xf32> to vector<1x128xf32>
    %c1_18 = arith.constant 1 : index
    %c1_19 = arith.constant 1 : index
    %90 = memref.load %arg1[%c1_18, %c1_19] : memref<3x4xf32, #tpu.memory_space<smem>>
    %91 = vector.broadcast %90 : f32 to vector<1x128xf32>
    %92 = arith.cmpf oeq, %89, %91 : vector<1x128xf32>
    %93 = arith.andi %88, %92 : vector<1x128xi1>
    %94 = vector.extract_strided_slice %0 {offsets = [2, 0], sizes = [1, 128], strides = [1, 1]} : vector<4x128xf32> to vector<1x128xf32>
    %c1_20 = arith.constant 1 : index
    %c2_21 = arith.constant 2 : index
    %95 = memref.load %arg1[%c1_20, %c2_21] : memref<3x4xf32, #tpu.memory_space<smem>>
    %96 = vector.broadcast %95 : f32 to vector<1x128xf32>
    %97 = arith.cmpf oeq, %94, %96 : vector<1x128xf32>
    %98 = arith.andi %93, %97 : vector<1x128xi1>
    %99 = vector.extract_strided_slice %0 {offsets = [3, 0], sizes = [1, 128], strides = [1, 1]} : vector<4x128xf32> to vector<1x128xf32>
    %c1_22 = arith.constant 1 : index
    %c3_23 = arith.constant 3 : index
    %100 = memref.load %arg1[%c1_22, %c3_23] : memref<3x4xf32, #tpu.memory_space<smem>>
    %101 = vector.broadcast %100 : f32 to vector<1x128xf32>
    %102 = arith.cmpf oeq, %99, %101 : vector<1x128xf32>
    %103 = arith.andi %98, %102 : vector<1x128xi1>
    %104 = vector.extract_strided_slice %1 {offsets = [0, 1], sizes = [32, 1], strides = [1, 1]} : vector<32x3xf32> to vector<32x1xf32>
    %105 = vector.shape_cast %104 : vector<32x1xf32> to vector<32x1xf32>
    %106 = vector.broadcast %105 : vector<32x1xf32> to vector<32x128xf32>
    %107 = vector.shape_cast %103 : vector<1x128xi1> to vector<1x128xi1>
    %108 = vector.broadcast %107 : vector<1x128xi1> to vector<32x128xi1>
    %109 = arith.select %108, %106, %84 : vector<32x128xi1>, vector<32x128xf32>
    %110 = vector.extract_strided_slice %0 {offsets = [0, 0], sizes = [1, 128], strides = [1, 1]} : vector<4x128xf32> to vector<1x128xf32>
    %c2_24 = arith.constant 2 : index
    %c0_25 = arith.constant 0 : index
    %111 = memref.load %arg1[%c2_24, %c0_25] : memref<3x4xf32, #tpu.memory_space<smem>>
    %112 = vector.broadcast %111 : f32 to vector<1x128xf32>
    %113 = arith.cmpf oeq, %110, %112 : vector<1x128xf32>
    %114 = vector.extract_strided_slice %0 {offsets = [1, 0], sizes = [1, 128], strides = [1, 1]} : vector<4x128xf32> to vector<1x128xf32>
    %c2_26 = arith.constant 2 : index
    %c1_27 = arith.constant 1 : index
    %115 = memref.load %arg1[%c2_26, %c1_27] : memref<3x4xf32, #tpu.memory_space<smem>>
    %116 = vector.broadcast %115 : f32 to vector<1x128xf32>
    %117 = arith.cmpf oeq, %114, %116 : vector<1x128xf32>
    %118 = arith.andi %113, %117 : vector<1x128xi1>
    %119 = vector.extract_strided_slice %0 {offsets = [2, 0], sizes = [1, 128], strides = [1, 1]} : vector<4x128xf32> to vector<1x128xf32>
    %c2_28 = arith.constant 2 : index
    %c2_29 = arith.constant 2 : index
    %120 = memref.load %arg1[%c2_28, %c2_29] : memref<3x4xf32, #tpu.memory_space<smem>>
    %121 = vector.broadcast %120 : f32 to vector<1x128xf32>
    %122 = arith.cmpf oeq, %119, %121 : vector<1x128xf32>
    %123 = arith.andi %118, %122 : vector<1x128xi1>
    %124 = vector.extract_strided_slice %0 {offsets = [3, 0], sizes = [1, 128], strides = [1, 1]} : vector<4x128xf32> to vector<1x128xf32>
    %c2_30 = arith.constant 2 : index
    %c3_31 = arith.constant 3 : index
    %125 = memref.load %arg1[%c2_30, %c3_31] : memref<3x4xf32, #tpu.memory_space<smem>>
    %126 = vector.broadcast %125 : f32 to vector<1x128xf32>
    %127 = arith.cmpf oeq, %124, %126 : vector<1x128xf32>
    %128 = arith.andi %123, %127 : vector<1x128xi1>
    %129 = vector.extract_strided_slice %1 {offsets = [0, 2], sizes = [32, 1], strides = [1, 1]} : vector<32x3xf32> to vector<32x1xf32>
    %130 = vector.shape_cast %129 : vector<32x1xf32> to vector<32x1xf32>
    %131 = vector.broadcast %130 : vector<32x1xf32> to vector<32x128xf32>
    %132 = vector.shape_cast %128 : vector<1x128xi1> to vector<1x128xi1>
    %133 = vector.broadcast %132 : vector<1x128xi1> to vector<32x128xi1>
    %134 = arith.select %133, %131, %109 : vector<32x128xi1>, vector<32x128xf32>
    %c0_32 = arith.constant 0 : index
    %c0_33 = arith.constant 0 : index
    %135 = vector.load %arg8[%c0_32, %c0_33] : memref<32x128xf32, #tpu.memory_space<vmem>>, vector<32x128xf32>
    tpu.vector_store %arg8[%c0_32, %c0_33], %134 {strides = array<i32>} : memref<32x128xf32, #tpu.memory_space<vmem>>, vector<32x128xf32>,
    return
  }
  func.func @transform_0(%arg0: i32) -> (i32, i32) {
    %c0_i32 = arith.constant 0 : i32
    %c0_i32_0 = arith.constant 0 : i32
    %c0_i32_1 = arith.constant 0 : i32
    return %c0_i32, %c0_i32_0 : i32, i32
  }
  func.func @transform_1(%arg0: i32) -> (i32, i32) {
    %c0_i32 = arith.constant 0 : i32
    %c0_i32_0 = arith.constant 0 : i32
    return %c0_i32, %arg0 : i32, i32
  }
  func.func @transform_2(%arg0: i32) -> (i32, i32) {
    %c0_i32 = arith.constant 0 : i32
    %c0_i32_0 = arith.constant 0 : i32
    %c0_i32_1 = arith.constant 0 : i32
    return %c0_i32, %c0_i32_0 : i32, i32
  }
  func.func @transform_3(%arg0: i32) -> (i32, i32) {
    %c0_i32 = arith.constant 0 : i32
    %c0_i32_0 = arith.constant 0 : i32
    %c0_i32_1 = arith.constant 0 : i32
    return %c0_i32, %c0_i32_0 : i32, i32
  }
  func.func @transform_4(%arg0: i32) -> (i32, i32) {
    %c0_i32 = arith.constant 0 : i32
    %c0_i32_0 = arith.constant 0 : i32
    %c0_i32_1 = arith.constant 0 : i32
    return %c0_i32, %c0_i32_0 : i32, i32
  }
  func.func @transform_5(%arg0: i32) -> (i32, i32) {
    %c0_i32 = arith.constant 0 : i32
    %c0_i32_0 = arith.constant 0 : i32
    %c0_i32_1 = arith.constant 0 : i32
    return %c0_i32, %c0_i32_0 : i32, i32
  }
  func.func @transform_6(%arg0: i32) -> (i32, i32) {
    %c0_i32 = arith.constant 0 : i32
    %c0_i32_0 = arith.constant 0 : i32
    %c0_i32_1 = arith.constant 0 : i32
    return %c0_i32, %c0_i32_0 : i32, i32
  }
  func.func @transform_7(%arg0: i32) -> (i32, i32) {
    %c0_i32 = arith.constant 0 : i32
    %c0_i32_0 = arith.constant 0 : i32
    return %c0_i32, %arg0 : i32, i32
  }
}

</mosaic_0001>

<llo_original>
// kernel: tpu_custom_call.1
$region0: #{tpu_custom_call.1}
  #allocation0 [shape = 'u32[]', space=smem, size = 0x4, offset = 0x4, fixed_abs, tag = 'smem constant byte address 0x4 - core index']
  #allocation1 [shape = 'u32[72,128]{1,0:T(1,128)}', space=vmem, size = 0x9000, scoped, tag = 'internal scratch']
  %s0 = inlined_call_operand.vmem [shape: f32[3,4], index: 0, kind: input, shape index: {}]
  %s1 = inlined_call_operand.vmem [shape: f32[4,128], index: 1, kind: input, shape index: {}]
  %s2 = inlined_call_operand.vmem [shape: f32[32,3], index: 2, kind: input, shape index: {}]
  %s3 = inlined_call_operand.vmem [shape: f32[4,4], index: 3, kind: input, shape index: {}]
  %s4 = inlined_call_operand.vmem [shape: f32[4,1], index: 4, kind: input, shape index: {}]
  %s5 = inlined_call_operand.vmem [shape: f32[32,4], index: 5, kind: input, shape index: {}]
  %s6 = inlined_call_operand.vmem [shape: f32[32,1], index: 6, kind: input, shape index: {}]
  %s7 = inlined_call_operand.hbm [shape: f32[32,128], index: 7, kind: output, shape index: {}]
  %s8 = sld [smem:[#allocation0]]
  $region42: #{tpu_custom_call.1} parent=0
    _
  %s10 = ssub.s32 1, %s8
  %s11 = scalar_select 0, %s10, %s8
  $region1: #{tpu_custom_call.1} parent=0
    #allocation2 [shape = 'u8[2048]{0}', space=smem, size = 0x800, scoped, tag = 'input window, operand 0, single buffered']
    #allocation3 [shape = 's32[1]{0}', space=sflag, size = 0x4, scoped, tag = 'scoped memory for tpu_custom_call.1']
    #allocation4 [shape = 's32[1]{0}', space=sflag, size = 0x4, scoped, tag = 'scoped memory for tpu_custom_call.1']
    #allocation5 [shape = 'u8[16384]{0}', space=vmem, size = 0x4000, scoped, tag = 'output window, operand 0, single buffered']
    %12 = vsyncpa [#allocation4], 0
    %13 = vsyncpa [#allocation3], 0
    // Predicated region
    $region2: #{tpu_custom_call.1} parent=1 // pred_check
      _
    $region3: #{tpu_custom_call.1} parent=1 // pred_check_branch
      %15 = sbr.rel (0) target = $region5
    $region4: #{tpu_custom_call.1} parent=1 // pred_region
      %17 = vsyncadd [#allocation4], 0
      %s19 = sshll.u32 %s0, 4
      %s20 = int_to_ptr.vmem [resolvable:$true] %s19
      %22 = dma.vmem_to_smem %s20, 64, [#allocation2], [#allocation4]
    $region5: #{tpu_custom_call.1} parent=1 // pred_fallthru
      _
    // Predicated region
    $region6: #{tpu_custom_call.1} parent=1 // pred_check
      _
    $region7: #{tpu_custom_call.1} parent=1 // pred_check_branch
      %24 = sbr.rel (0) target = $region9
    $region8: #{tpu_custom_call.1} parent=1 // pred_region
      _
    $region9: #{tpu_custom_call.1} parent=1 // pred_fallthru
      _
    // Predicated region
    $region10: #{tpu_custom_call.1} parent=1 // pred_check
      _
    $region11: #{tpu_custom_call.1} parent=1 // pred_check_branch
      %26 = sbr.rel (0) target = $region13
    $region12: #{tpu_custom_call.1} parent=1 // pred_region
      _
    $region13: #{tpu_custom_call.1} parent=1 // pred_fallthru
      _
    // Predicated region
    $region14: #{tpu_custom_call.1} parent=1 // pred_check
      _
    $region15: #{tpu_custom_call.1} parent=1 // pred_check_branch
      %28 = sbr.rel (0) target = $region17
    $region16: #{tpu_custom_call.1} parent=1 // pred_region
      _
    $region17: #{tpu_custom_call.1} parent=1 // pred_fallthru
      _
    // Predicated region
    $region18: #{tpu_custom_call.1} parent=1 // pred_check
      _
    $region19: #{tpu_custom_call.1} parent=1 // pred_check_branch
      %30 = sbr.rel (0) target = $region21
    $region20: #{tpu_custom_call.1} parent=1 // pred_region
      _
    $region21: #{tpu_custom_call.1} parent=1 // pred_fallthru
      _
    // Predicated region
    $region22: #{tpu_custom_call.1} parent=1 // pred_check
      _
    $region23: #{tpu_custom_call.1} parent=1 // pred_check_branch
      %32 = sbr.rel (0) target = $region25
    $region24: #{tpu_custom_call.1} parent=1 // pred_region
      _
    $region25: #{tpu_custom_call.1} parent=1 // pred_fallthru
      _
    // Predicated region
    $region26: #{tpu_custom_call.1} parent=1 // pred_check
      _
    $region27: #{tpu_custom_call.1} parent=1 // pred_check_branch
      %34 = sbr.rel (0) target = $region29
    $region28: #{tpu_custom_call.1} parent=1 // pred_region
      _
    $region29: #{tpu_custom_call.1} parent=1 // pred_fallthru
      _
    // Predicated region
    $region30: #{tpu_custom_call.1} parent=1 // pred_check
      _
    $region31: #{tpu_custom_call.1} parent=1 // pred_check_branch
      %36 = sbr.rel (0) target = $region33
    $region32: #{tpu_custom_call.1} parent=1 // pred_region
      %38 = dma.done [#allocation4], 64
    $region33: #{tpu_custom_call.1} parent=1 // pred_fallthru
      _
    %39 = sfence
    %v40 = vld [vmem:[%s1] sm:$0xf]
    %v41 = vld [vmem:[%s2] sm:$0xff]
    %v42 = vld [vmem:[%s2 + $0x8] sm:$0xff]
    %v43 = vld [vmem:[%s2 + $0x10] sm:$0xff]
    %v44 = vld [vmem:[%s2 + $0x18] sm:$0xff]
    %v45 = vld [vmem:[%s3] sm:$0xf]
    %v46 = vld [vmem:[%s5] sm:$0xff]
    %v47 = vld [vmem:[%s5 + $0x8] sm:$0xff]
    %v48 = vld [vmem:[%s5 + $0x10] sm:$0xff]
    %v49 = vld [vmem:[%s5 + $0x18] sm:$0xff]
    %v50 = vld [vmem:[%s4] sm:$0xf]
    %52 = vset.pattern.permute.xlu0 0
    %53 = vperm.xlu0 %52, %v50
    %v54 = vpop.permute.xlu0 %53
    %57 = vset.pattern.permute.xlu0 0
    %58 = vperm.xlu0 %57, %v45
    %v59 = vpop.permute.xlu0 %58
    %v61 = vperm.slane %v40, 0
    %v62 = vmul.f32 %v59, %v61
    %v63 = vadd.f32 %v54, %v62
    %64 = vset.pattern.permute.xlu0 1
    %65 = vperm.xlu0 %64, %v45
    %v66 = vpop.permute.xlu0 %65
    %v68 = vperm.slane %v40, 1
    %v69 = vmul.f32 %v66, %v68
    %v70 = vadd.f32 %v63, %v69
    %71 = vset.pattern.permute.xlu0 2
    %72 = vperm.xlu0 %71, %v45
    %v73 = vpop.permute.xlu0 %72
    %v75 = vperm.slane %v40, 2
    %v76 = vmul.f32 %v73, %v75
    %v77 = vadd.f32 %v70, %v76
    %78 = vset.pattern.permute.xlu0 3
    %79 = vperm.xlu0 %78, %v45
    %v80 = vpop.permute.xlu0 %79
    %v82 = vperm.slane %v40, 3
    %v83 = vmul.f32 %v80, %v82
    %v84 = vadd.f32 %v77, %v83
    %v85 = vmax.f32 %v84, 0.0
    %v86 = vld [vmem:[%s6] sm:$0xff]
    %v87 = vld [vmem:[%s6 + $0x8] sm:$0xff]
    %v88 = vld [vmem:[%s6 + $0x10] sm:$0xff]
    %v89 = vld [vmem:[%s6 + $0x18] sm:$0xff]
    %91 = vset.pattern.permute.xlu0 0
    %92 = vperm.xlu0 %91, %v86
    %v93 = vpop.permute.xlu0 %92
    %96 = vset.pattern.permute.xlu0 0
    %97 = vperm.xlu0 %96, %v87
    %v98 = vpop.permute.xlu0 %97
    %101 = vset.pattern.permute.xlu0 0
    %102 = vperm.xlu0 %101, %v88
    %v103 = vpop.permute.xlu0 %102
    %106 = vset.pattern.permute.xlu0 0
    %107 = vperm.xlu0 %106, %v89
    %v108 = vpop.permute.xlu0 %107
    %111 = vset.pattern.permute.xlu0 0
    %112 = vperm.xlu0 %111, %v46
    %v113 = vpop.permute.xlu0 %112
    %116 = vset.pattern.permute.xlu0 0
    %117 = vperm.xlu0 %116, %v47
    %v118 = vpop.permute.xlu0 %117
    %121 = vset.pattern.permute.xlu0 0
    %122 = vperm.xlu0 %121, %v48
    %v123 = vpop.permute.xlu0 %122
    %126 = vset.pattern.permute.xlu0 0
    %127 = vperm.xlu0 %126, %v49
    %v128 = vpop.permute.xlu0 %127
    %v130 = vperm.slane %v85, 0
    %v131 = vmul.f32 %v113, %v130
    %v132 = vmul.f32 %v118, %v130
    %v133 = vmul.f32 %v123, %v130
    %v134 = vmul.f32 %v128, %v130
    %v135 = vadd.f32 %v93, %v131
    %v136 = vadd.f32 %v98, %v132
    %v137 = vadd.f32 %v103, %v133
    %v138 = vadd.f32 %v108, %v134
    %139 = vset.pattern.permute.xlu0 1
    %140 = vperm.xlu0 %139, %v46
    %v141 = vpop.permute.xlu0 %140
    %143 = vset.pattern.permute.xlu0 1
    %144 = vperm.xlu0 %143, %v47
    %v145 = vpop.permute.xlu0 %144
    %147 = vset.pattern.permute.xlu0 1
    %148 = vperm.xlu0 %147, %v48
    %v149 = vpop.permute.xlu0 %148
    %151 = vset.pattern.permute.xlu0 1
    %152 = vperm.xlu0 %151, %v49
    %v153 = vpop.permute.xlu0 %152
    %v155 = vperm.slane %v85, 1
    %v156 = vmul.f32 %v141, %v155
    %v157 = vmul.f32 %v145, %v155
    %v158 = vmul.f32 %v149, %v155
    %v159 = vmul.f32 %v153, %v155
    %v160 = vadd.f32 %v135, %v156
    %v161 = vadd.f32 %v136, %v157
    %v162 = vadd.f32 %v137, %v158
    %v163 = vadd.f32 %v138, %v159
    %164 = vset.pattern.permute.xlu0 2
    %165 = vperm.xlu0 %164, %v46
    %v166 = vpop.permute.xlu0 %165
    %168 = vset.pattern.permute.xlu0 2
    %169 = vperm.xlu0 %168, %v47
    %v170 = vpop.permute.xlu0 %169
    %172 = vset.pattern.permute.xlu0 2
    %173 = vperm.xlu0 %172, %v48
    %v174 = vpop.permute.xlu0 %173
    %176 = vset.pattern.permute.xlu0 2
    %177 = vperm.xlu0 %176, %v49
    %v178 = vpop.permute.xlu0 %177
    %v180 = vperm.slane %v85, 2
    %v181 = vmul.f32 %v166, %v180
    %v182 = vmul.f32 %v170, %v180
    %v183 = vmul.f32 %v174, %v180
    %v184 = vmul.f32 %v178, %v180
    %v185 = vadd.f32 %v160, %v181
    %v186 = vadd.f32 %v161, %v182
    %v187 = vadd.f32 %v162, %v183
    %v188 = vadd.f32 %v163, %v184
    %189 = vset.pattern.permute.xlu0 3
    %190 = vperm.xlu0 %189, %v46
    %v191 = vpop.permute.xlu0 %190
    %193 = vset.pattern.permute.xlu0 3
    %194 = vperm.xlu0 %193, %v47
    %v195 = vpop.permute.xlu0 %194
    %197 = vset.pattern.permute.xlu0 3
    %198 = vperm.xlu0 %197, %v48
    %v199 = vpop.permute.xlu0 %198
    %201 = vset.pattern.permute.xlu0 3
    %202 = vperm.xlu0 %201, %v49
    %v203 = vpop.permute.xlu0 %202
    %v205 = vperm.slane %v85, 3
    %v206 = vmul.f32 %v191, %v205
    %v207 = vmul.f32 %v195, %v205
    %v208 = vmul.f32 %v199, %v205
    %v209 = vmul.f32 %v203, %v205
    %v210 = vadd.f32 %v185, %v206
    %v211 = vadd.f32 %v186, %v207
    %v212 = vadd.f32 %v187, %v208
    %v213 = vadd.f32 %v188, %v209
    %s214 = sld [smem:[#allocation2]]
    %v215 = vstv %s214
    %vm216 = vcmp.eq.f32.partialorder %v40, %v215
    %s217 = sld [smem:[#allocation2 + $0x1]]
    %v218 = vstv %s217
    %vm219 = vcmp.eq.f32.partialorder %v40, %v218
    %v220 = vsel %vm219, 1, 0
    %v221 = vrot.slane %v220, 1
    %vm222 = vcmp.ne.s32.totalorder %v221, 0
    %vm223 = vmand %vm216, %vm222
    %s224 = sld [smem:[#allocation2 + $0x2]]
    %v225 = vstv %s224
    %vm226 = vcmp.eq.f32.partialorder %v40, %v225
    %v227 = vsel %vm226, 1, 0
    %v228 = vrot.slane %v227, 2
    %vm229 = vcmp.ne.s32.totalorder %v228, 0
    %vm230 = vmand %vm223, %vm229
    %s231 = sld [smem:[#allocation2 + $0x3]]
    %v232 = vstv %s231
    %vm233 = vcmp.eq.f32.partialorder %v40, %v232
    %v234 = vsel %vm233, 1, 0
    %v235 = vrot.slane %v234, 3
    %vm236 = vcmp.ne.s32.totalorder %v235, 0
    %vm237 = vmand %vm230, %vm236
    %239 = vset.pattern.permute.xlu0 0
    %240 = vperm.xlu0 %239, %v41
    %v241 = vpop.permute.xlu0 %240
    %244 = vset.pattern.permute.xlu0 0
    %245 = vperm.xlu0 %244, %v42
    %v246 = vpop.permute.xlu0 %245
    %249 = vset.pattern.permute.xlu0 0
    %250 = vperm.xlu0 %249, %v43
    %v251 = vpop.permute.xlu0 %250
    %254 = vset.pattern.permute.xlu0 0
    %255 = vperm.xlu0 %254, %v44
    %v256 = vpop.permute.xlu0 %255
    %v258 = vsel %vm237, 1, 0
    %v259 = vperm.slane %v258, 0
    %vm260 = vcmp.eq.s32.totalorder %v259, 1
    %v261 = vsel %vm260, %v241, %v210
    %v262 = vsel %vm260, %v246, %v211
    %v263 = vsel %vm260, %v251, %v212
    %v264 = vsel %vm260, %v256, %v213
    %s265 = sld [smem:[#allocation2 + $0x80]]
    %v266 = vstv %s265
    %vm267 = vcmp.eq.f32.partialorder %v40, %v266
    %s268 = sld [smem:[#allocation2 + $0x81]]
    %v269 = vstv %s268
    %vm270 = vcmp.eq.f32.partialorder %v40, %v269
    %v271 = vsel %vm270, 1, 0
    %v272 = vrot.slane %v271, 1
    %vm273 = vcmp.ne.s32.totalorder %v272, 0
    %vm274 = vmand %vm267, %vm273
    %s275 = sld [smem:[#allocation2 + $0x82]]
    %v276 = vstv %s275
    %vm277 = vcmp.eq.f32.partialorder %v40, %v276
    %v278 = vsel %vm277, 1, 0
    %v279 = vrot.slane %v278, 2
    %vm280 = vcmp.ne.s32.totalorder %v279, 0
    %vm281 = vmand %vm274, %vm280
    %s282 = sld [smem:[#allocation2 + $0x83]]
    %v283 = vstv %s282
    %vm284 = vcmp.eq.f32.partialorder %v40, %v283
    %v285 = vsel %vm284, 1, 0
    %v286 = vrot.slane %v285, 3
    %vm287 = vcmp.ne.s32.totalorder %v286, 0
    %vm288 = vmand %vm281, %vm287
    %289 = vset.pattern.permute.xlu0 1
    %290 = vperm.xlu0 %289, %v41
    %v291 = vpop.permute.xlu0 %290
    %293 = vset.pattern.permute.xlu0 1
    %294 = vperm.xlu0 %293, %v42
    %v295 = vpop.permute.xlu0 %294
    %297 = vset.pattern.permute.xlu0 1
    %298 = vperm.xlu0 %297, %v43
    %v299 = vpop.permute.xlu0 %298
    %301 = vset.pattern.permute.xlu0 1
    %302 = vperm.xlu0 %301, %v44
    %v303 = vpop.permute.xlu0 %302
    %v305 = vsel %vm288, 1, 0
    %v306 = vperm.slane %v305, 0
    %vm307 = vcmp.eq.s32.totalorder %v306, 1
    %v308 = vsel %vm307, %v291, %v261
    %v309 = vsel %vm307, %v295, %v262
    %v310 = vsel %vm307, %v299, %v263
    %v311 = vsel %vm307, %v303, %v264
    %s312 = sld [smem:[#allocation2 + $0x100]]
    %v313 = vstv %s312
    %vm314 = vcmp.eq.f32.partialorder %v40, %v313
    %s315 = sld [smem:[#allocation2 + $0x101]]
    %v316 = vstv %s315
    %vm317 = vcmp.eq.f32.partialorder %v40, %v316
    %v318 = vsel %vm317, 1, 0
    %v319 = vrot.slane %v318, 1
    %vm320 = vcmp.ne.s32.totalorder %v319, 0
    %vm321 = vmand %vm314, %vm320
    %s322 = sld [smem:[#allocation2 + $0x102]]
    %v323 = vstv %s322
    %vm324 = vcmp.eq.f32.partialorder %v40, %v323
    %v325 = vsel %vm324, 1, 0
    %v326 = vrot.slane %v325, 2
    %vm327 = vcmp.ne.s32.totalorder %v326, 0
    %vm328 = vmand %vm321, %vm327
    %s329 = sld [smem:[#allocation2 + $0x103]]
    %v330 = vstv %s329
    %vm331 = vcmp.eq.f32.partialorder %v40, %v330
    %v332 = vsel %vm331, 1, 0
    %v333 = vrot.slane %v332, 3
    %vm334 = vcmp.ne.s32.totalorder %v333, 0
    %vm335 = vmand %vm328, %vm334
    %336 = vset.pattern.permute.xlu0 2
    %337 = vperm.xlu0 %336, %v41
    %v338 = vpop.permute.xlu0 %337
    %340 = vset.pattern.permute.xlu0 2
    %341 = vperm.xlu0 %340, %v42
    %v342 = vpop.permute.xlu0 %341
    %344 = vset.pattern.permute.xlu0 2
    %345 = vperm.xlu0 %344, %v43
    %v346 = vpop.permute.xlu0 %345
    %348 = vset.pattern.permute.xlu0 2
    %349 = vperm.xlu0 %348, %v44
    %v350 = vpop.permute.xlu0 %349
    %v352 = vsel %vm335, 1, 0
    %v353 = vperm.slane %v352, 0
    %vm354 = vcmp.eq.s32.totalorder %v353, 1
    %v355 = vsel %vm354, %v338, %v308
    %v356 = vsel %vm354, %v342, %v309
    %v357 = vsel %vm354, %v346, %v310
    %v358 = vsel %vm354, %v350, %v311
    %359 = vst [vmem:[#allocation5] sm:$0xff] %v355
    %360 = vst [vmem:[#allocation5 + $0x8] sm:$0xff] %v356
    %361 = vst [vmem:[#allocation5 + $0x10] sm:$0xff] %v357
    %362 = vst [vmem:[#allocation5 + $0x18] sm:$0xff] %v358
    // Predicated region
    $region34: #{tpu_custom_call.1} parent=1 // pred_check
      _
    $region35: #{tpu_custom_call.1} parent=1 // pred_check_branch
      %364 = sbr.rel (0) target = $region37
    $region36: #{tpu_custom_call.1} parent=1 // pred_region
      %366 = vsyncadd [#allocation3], 0
      %s367 = sshll.u32 [#allocation5], 4
      %s368 = int_to_ptr.vmem [resolvable:$true] %s367
      %s369 = sshll.u32 %s7, 4
      %s370 = int_to_ptr.hbm [resolvable:$true] %s369
      %375 = dma.vmem_to_hbm [thread:$0]  %s368, 512, %s370, [#allocation3], 128, 128, 8
    $region37: #{tpu_custom_call.1} parent=1 // pred_fallthru
      _
    // Predicated region
    $region38: #{tpu_custom_call.1} parent=1 // pred_check
      _
    $region39: #{tpu_custom_call.1} parent=1 // pred_check_branch
      %377 = sbr.rel (0) target = $region41
    $region40: #{tpu_custom_call.1} parent=1 // pred_region
      %379 = dma.done [#allocation3], 512
    $region41: #{tpu_custom_call.1} parent=1 // pred_fallthru
      _
    %380 = vsyncpa [#allocation3], 1
    %381 = vsyncpa [#allocation4], 1

</llo_original>
